<compile_context>
chip_gen: v5e
topology: v5e:2x2
jax: 0.10.0
libtpu: 0.0.40
codegen_flags: <defaults>
</compile_context>

<pallas_src>
import jax
import jax.numpy as jnp
from jax import lax
from jax.experimental import pallas as pl
from jax.experimental.pallas import tpu as pltpu


def _round_up(x, m):
    return ((x + m - 1) // m) * m


def fcnet_kernel(x_ref, v_ref, s_ref, b_ref, o_ref):
    # x_ref: (tm, in_dim)     f32 tile of the flattened input rows (pipelined)
    # v_ref: (O_pad, in_dim)  raw (unnormalized) weight V, resident across tiles
    # s_ref: (1, 1) SMEM      scalar s = g / ||V||_F (precomputed in wrapper)
    # b_ref: (1, O_pad)       bias, zero-padded past out_dim, resident
    # o_ref: (tm, O_pad)      lane-dense output tile
    x = x_ref[...]
    v = v_ref[...]
    # y[m, o] = sum_k x[m, k] * v[o, k]  -- contract on in_dim, no transpose.
    y = lax.dot_general(
        x, v,
        dimension_numbers=(((1,), (1,)), ((), ())),
        preferred_element_type=jnp.float32,
    )
    # Weight-norm scale folded into the epilogue, fused with the bias add.
    s = s_ref[0, 0]
    y = y * s + b_ref[...]
    # Dropout in eval mode == identity.
    o_ref[...] = y.astype(o_ref.dtype)


def fcnet_forward(x, v, g, b, *, tm=512):
    """x: [B, N, in_dim]; v: [out_dim, in_dim]; g: scalar; b: [out_dim]."""
    B, N, in_dim = x.shape
    out_dim = v.shape[0]
    M = B * N

    # Weight-norm (dim=None): scalar gain over the Frobenius norm of V.
    # Computed once here; the kernel only sees the folded scalar.
    s = (g.astype(jnp.float32)
         / jnp.sqrt(jnp.sum(v.astype(jnp.float32) ** 2))).reshape(1, 1)

    # Lane-dense output: pad out_dim up to a multiple of 128 so stores are
    # unmasked vst; padding rows of V / bias are zero and are sliced off below.
    O_pad = _round_up(max(out_dim, 128), 128)
    v_p = jnp.zeros((O_pad, in_dim), jnp.float32).at[:out_dim].set(
        v.astype(jnp.float32))
    b_p = jnp.zeros((1, O_pad), jnp.float32).at[0, :out_dim].set(
        b.astype(jnp.float32))

    # Tile the row dimension; pad M up to a multiple of the tile.
    tm = min(tm, _round_up(M, 8))
    M_pad = _round_up(M, tm)
    x2d = x.reshape(M, in_dim).astype(jnp.float32)
    if M_pad != M:
        x2d = jnp.pad(x2d, ((0, M_pad - M), (0, 0)))

    grid = (M_pad // tm,)

    cost = pl.CostEstimate(
        flops=2 * M_pad * in_dim * O_pad,
        transcendentals=0,
        bytes_accessed=(x2d.size + v_p.size + b_p.size + M_pad * O_pad) * 4,
    )

    out2d = pl.pallas_call(
        fcnet_kernel,
        out_shape=jax.ShapeDtypeStruct((M_pad, O_pad), x.dtype),
        grid=grid,
        in_specs=[
            pl.BlockSpec((tm, in_dim), lambda i: (i, 0)),     # x tile (pipelined)
            pl.BlockSpec((O_pad, in_dim), lambda i: (0, 0)),  # V resident
            pl.BlockSpec(memory_space=pltpu.SMEM),            # scalar g/||V||_F
            pl.BlockSpec((1, O_pad), lambda i: (0, 0)),       # bias resident
        ],
        out_specs=pl.BlockSpec((tm, O_pad), lambda i: (i, 0)),
        compiler_params=pltpu.CompilerParams(
            dimension_semantics=("parallel",)),               # shard M tiles on 2 TCs (v7x)
        cost_estimate=cost,
    )(x2d, v_p, s, b_p)

    return out2d[:M, :out_dim].reshape(B, N, out_dim)


if __name__ == "__main__":
    # Small shapes consistent with FCNet usage in VQA models:
    # x: [batch=2, num_objs=8, in_dim=64] -> out: [2, 8, out_dim=32]
    B, N, in_dim, out_dim = 2, 8, 64, 32
    dropout_p = 0.2  # unused at inference (identity)

    key = jax.random.PRNGKey(0)
    kx, kv, kg, kb = jax.random.split(key, 4)
    x = jax.random.normal(kx, (B, N, in_dim), dtype=jnp.float32)
    v = jax.random.normal(kv, (out_dim, in_dim), dtype=jnp.float32) * 0.1
    g = jax.random.normal(kg, (), dtype=jnp.float32) + 1.0   # scalar gain (dim=None)
    b = jax.random.normal(kb, (out_dim,), dtype=jnp.float32) * 0.1

    out = jax.block_until_ready(fcnet_forward(x, v, g, b))

    # Pure-JAX reference check of the weight-norm linear.
    w_ref = g * v / jnp.sqrt(jnp.sum(v * v))
    ref = (x.reshape(B * N, in_dim) @ w_ref.T + b).reshape(B, N, out_dim)
    assert jnp.allclose(out, ref, atol=1e-4, rtol=1e-4), "mismatch vs reference"

    print("KERNEL_OK")
</pallas_src>

<mosaic_0001>
module attributes {stable_mosaic.version = 11 : i64} {
  func.func @fcnet_kernel(%arg0: i32, %arg1: memref<16x64xf32, #tpu.memory_space<vmem>>, %arg2: memref<128x64xf32, #tpu.memory_space<vmem>>, %arg3: memref<1x1xf32, #tpu.memory_space<smem>>, %arg4: memref<1x128xf32, #tpu.memory_space<vmem>>, %arg5: memref<16x128xf32, #tpu.memory_space<vmem>>) attributes {dimension_semantics = [#tpu.dimension_semantics<parallel>], iteration_bounds = array<i64: 1>, scalar_prefetch = 0 : i64, scratch_operands = 0 : i64, tpu.core_type = #tpu.core_type<tc>, window_params = [{transform_indices = @transform_0, window_bounds = array<i64: 16, 64>}, {pipeline_mode = #tpu.pipeline_mode<synchronous>, transform_indices = @transform_1, window_bounds = array<i64: 128, 64>}, {transform_indices = @transform_2, window_bounds = array<i64: 1, 1>}, {pipeline_mode = #tpu.pipeline_mode<synchronous>, transform_indices = @transform_3, window_bounds = array<i64: 1, 128>}, {transform_indices = @transform_4, window_bounds = array<i64: 16, 128>}]} {
    %c0 = arith.constant 0 : index
    %c0_0 = arith.constant 0 : index
    %0 = vector.load %arg1[%c0, %c0_0] : memref<16x64xf32, #tpu.memory_space<vmem>>, vector<16x64xf32>
    %c0_1 = arith.constant 0 : index
    %c0_2 = arith.constant 0 : index
    %1 = vector.load %arg2[%c0_1, %c0_2] : memref<128x64xf32, #tpu.memory_space<vmem>>, vector<128x64xf32>
    %cst = arith.constant dense<0.000000e+00> : vector<16x128xf32>
    %2 = tpu.matmul %0, %1, %cst {dimension_numbers = #tpu.dot_dimension_numbers<[1], [1], [0], [0], [0, 0, 1, 0], [], []>} : vector<16x64xf32>, vector<128x64xf32>, vector<16x128xf32> -> vector<16x128xf32>
    %c0_3 = arith.constant 0 : index
    %c0_4 = arith.constant 0 : index
    %3 = memref.load %arg3[%c0_3, %c0_4] : memref<1x1xf32, #tpu.memory_space<smem>>
    %4 = vector.broadcast %3 : f32 to vector<16x128xf32>
    %5 = arith.mulf %2, %4 : vector<16x128xf32>
    %c0_5 = arith.constant 0 : index
    %c0_6 = arith.constant 0 : index
    %6 = vector.load %arg4[%c0_5, %c0_6] : memref<1x128xf32, #tpu.memory_space<vmem>>, vector<1x128xf32>
    %7 = vector.broadcast %6 : vector<1x128xf32> to vector<16x128xf32>
    %8 = arith.addf %5, %7 : vector<16x128xf32>
    %c0_7 = arith.constant 0 : index
    %c0_8 = arith.constant 0 : index
    %9 = vector.load %arg5[%c0_7, %c0_8] : memref<16x128xf32, #tpu.memory_space<vmem>>, vector<16x128xf32>
    tpu.vector_store %arg5[%c0_7, %c0_8], %8 {strides = array<i32>} : memref<16x128xf32, #tpu.memory_space<vmem>>, vector<16x128xf32>,
    return
  }
  func.func @transform_0(%arg0: i32) -> (i32, i32) {
    %c0_i32 = arith.constant 0 : i32
    %c0_i32_0 = arith.constant 0 : i32
    return %arg0, %c0_i32 : i32, i32
  }
  func.func @transform_1(%arg0: i32) -> (i32, i32) {
    %c0_i32 = arith.constant 0 : i32
    %c0_i32_0 = arith.constant 0 : i32
    %c0_i32_1 = arith.constant 0 : i32
    return %c0_i32, %c0_i32_0 : i32, i32
  }
  func.func @transform_2(%arg0: i32) -> (i32, i32) {
    %c0_i32 = arith.constant 0 : i32
    %c0_i32_0 = arith.constant 0 : i32
    %c0_i32_1 = arith.constant 0 : i32
    return %c0_i32, %c0_i32_0 : i32, i32
  }
  func.func @transform_3(%arg0: i32) -> (i32, i32) {
    %c0_i32 = arith.constant 0 : i32
    %c0_i32_0 = arith.constant 0 : i32
    %c0_i32_1 = arith.constant 0 : i32
    return %c0_i32, %c0_i32_0 : i32, i32
  }
  func.func @transform_4(%arg0: i32) -> (i32, i32) {
    %c0_i32 = arith.constant 0 : i32
    %c0_i32_0 = arith.constant 0 : i32
    return %arg0, %c0_i32 : i32, i32
  }
}

</mosaic_0001>

<llo_original>
// kernel: tpu_custom_call.1
$region0: #{tpu_custom_call.1}
  #allocation0 [shape = 'u32[]', space=smem, size = 0x4, offset = 0x4, fixed_abs, tag = 'smem constant byte address 0x4 - core index']
  #allocation1 [shape = 'u32[72,128]{1,0:T(1,128)}', space=vmem, size = 0x9000, scoped, tag = 'internal scratch']
  #allocation2 [shape = 'f32[1,1]{1,0:T(1,128)S(6)}', space=smem, size = 0x200, scoped, tag = 'scoped memory for tpu_custom_call.1']
  %s0 = inlined_call_operand.vmem [shape: f32[16,64], index: 0, kind: input, shape index: {}]
  %s1 = inlined_call_operand.vmem [shape: f32[128,64], index: 1, kind: input, shape index: {}]
  %s2 = inlined_call_operand.<no memory space> [shape: f32[1,1], index: 2, kind: input, shape index: {}]
  %s3 = inlined_call_operand.vmem [shape: f32[1,128], index: 3, kind: input, shape index: {}]
  %s4 = inlined_call_operand.hbm [shape: f32[16,128], index: 4, kind: output, shape index: {}]
  %s5 = sld [smem:[#allocation0]]
  $region26: #{tpu_custom_call.1} parent=0
    _
  %s7 = ssub.s32 1, %s5
  %s8 = scalar_select 0, %s7, %s5
  %9 = sst [smem:[#allocation2]] %s2
  $region1: #{tpu_custom_call.1} parent=0
    #allocation3 [shape = 'u8[8192]{0}', space=vmem, size = 0x2000, scoped, tag = 'output window, operand 0, single buffered']
    #allocation4 [shape = 's32[1]{0}', space=sflag, size = 0x4, scoped, tag = 'scoped memory for tpu_custom_call.1']
    %10 = vsyncpa [#allocation4], 0
    // Predicated region
    $region2: #{tpu_custom_call.1} parent=1 // pred_check
      _
    $region3: #{tpu_custom_call.1} parent=1 // pred_check_branch
      %12 = sbr.rel (0) target = $region5
    $region4: #{tpu_custom_call.1} parent=1 // pred_region
      _
    $region5: #{tpu_custom_call.1} parent=1 // pred_fallthru
      _
    // Predicated region
    $region6: #{tpu_custom_call.1} parent=1 // pred_check
      _
    $region7: #{tpu_custom_call.1} parent=1 // pred_check_branch
      %14 = sbr.rel (0) target = $region9
    $region8: #{tpu_custom_call.1} parent=1 // pred_region
      _
    $region9: #{tpu_custom_call.1} parent=1 // pred_fallthru
      _
    // Predicated region
    $region10: #{tpu_custom_call.1} parent=1 // pred_check
      _
    $region11: #{tpu_custom_call.1} parent=1 // pred_check_branch
      %16 = sbr.rel (0) target = $region13
    $region12: #{tpu_custom_call.1} parent=1 // pred_region
      _
    $region13: #{tpu_custom_call.1} parent=1 // pred_fallthru
      _
    // Predicated region
    $region14: #{tpu_custom_call.1} parent=1 // pred_check
      _
    $region15: #{tpu_custom_call.1} parent=1 // pred_check_branch
      %18 = sbr.rel (0) target = $region17
    $region16: #{tpu_custom_call.1} parent=1 // pred_region
      _
    $region17: #{tpu_custom_call.1} parent=1 // pred_fallthru
      _
    %v19 = vld [vmem:[%s0] sm:$0xff]
    %v20 = vld [vmem:[%s0 + $0x8] sm:$0xff]
    %v21 = vld [vmem:[%s1] sm:$0xff]
    %v22 = vld [vmem:[%s1 + $0x8] sm:$0xff]
    %v23 = vld [vmem:[%s1 + $0x10] sm:$0xff]
    %v24 = vld [vmem:[%s1 + $0x18] sm:$0xff]
    %v25 = vld [vmem:[%s1 + $0x20] sm:$0xff]
    %v26 = vld [vmem:[%s1 + $0x28] sm:$0xff]
    %v27 = vld [vmem:[%s1 + $0x30] sm:$0xff]
    %v28 = vld [vmem:[%s1 + $0x38] sm:$0xff]
    %v29 = vld [vmem:[%s1 + $0x40] sm:$0xff]
    %v30 = vld [vmem:[%s1 + $0x48] sm:$0xff]
    %v31 = vld [vmem:[%s1 + $0x50] sm:$0xff]
    %v32 = vld [vmem:[%s1 + $0x58] sm:$0xff]
    %v33 = vld [vmem:[%s1 + $0x60] sm:$0xff]
    %v34 = vld [vmem:[%s1 + $0x68] sm:$0xff]
    %v35 = vld [vmem:[%s1 + $0x70] sm:$0xff]
    %v36 = vld [vmem:[%s1 + $0x78] sm:$0xff]
    %vm37 = vcmask 523264
    %v39 = vsel %vm37, %v19, 0
    %v42 = vsel %vm37, %v20, 0
    %v45 = vsel %vm37, %v21, 0
    %v48 = vsel %vm37, %v22, 0
    %v51 = vsel %vm37, %v23, 0
    %v54 = vsel %vm37, %v24, 0
    %v57 = vsel %vm37, %v25, 0
    %v60 = vsel %vm37, %v26, 0
    %v63 = vsel %vm37, %v27, 0
    %v66 = vsel %vm37, %v28, 0
    %v69 = vsel %vm37, %v29, 0
    %v72 = vsel %vm37, %v30, 0
    %v75 = vsel %vm37, %v31, 0
    %v78 = vsel %vm37, %v32, 0
    %v81 = vsel %vm37, %v33, 0
    %v84 = vsel %vm37, %v34, 0
    %v87 = vsel %vm37, %v35, 0
    %v90 = vsel %vm37, %v36, 0
    %92 = vmatpush.xpose.msra.mxu0 %v90
    %93 = vmatpush.xpose.msra.mxu0 %v87
    %94 = vmatpush.xpose.msra.mxu0 %v84
    %95 = vmatpush.xpose.msra.mxu0 %v81
    %96 = vmatpush.xpose.msra.mxu0 %v78
    %97 = vmatpush.xpose.msra.mxu0 %v75
    %98 = vmatpush.xpose.msra.mxu0 %v72
    %99 = vmatpush.xpose.msra.mxu0 %v69
    %100 = vmatpush.xpose.msra.mxu0 %v66
    %101 = vmatpush.xpose.msra.mxu0 %v63
    %102 = vmatpush.xpose.msra.mxu0 %v60
    %103 = vmatpush.xpose.msra.mxu0 %v57
    %104 = vmatpush.xpose.msra.mxu0 %v54
    %105 = vmatpush.xpose.msra.mxu0 %v51
    %106 = vmatpush.xpose.msra.mxu0 %v48
    %107 = vmatpush.xpose.msra.mxu0 %v45
    %108 = vmatmul.f32.gmra.mxu0 %v39
    %v109 = vpop.f32.mrf.mxu0
    %v110 = vadd.f32 0.0, %v109
    %111 = vmatmul.f32.gmra.mxu0 %v42
    %v112 = vpop.f32.mrf.mxu0
    %v113 = vadd.f32 0.0, %v112
    %114 = vdwg.mxu0
    %s115 = sld [smem:[#allocation2]]
    %v116 = vstv %s115
    %v117 = vmul.f32 %v110, %v116
    %v118 = vmul.f32 %v113, %v116
    %v119 = vld [vmem:[%s3] sm:$0x1]
    %v121 = vperm.slane %v119, 0
    %v123 = vadd.f32 %v117, %v121
    %v124 = vadd.f32 %v118, %v121
    %125 = vst [vmem:[#allocation3] sm:$0xff] %v123
    %126 = vst [vmem:[#allocation3 + $0x8] sm:$0xff] %v124
    // Predicated region
    $region18: #{tpu_custom_call.1} parent=1 // pred_check
      _
    $region19: #{tpu_custom_call.1} parent=1 // pred_check_branch
      %128 = sbr.rel (0) target = $region21
    $region20: #{tpu_custom_call.1} parent=1 // pred_region
      %130 = vsyncadd [#allocation4], 0
      %s131 = sshll.u32 [#allocation3], 4
      %s132 = int_to_ptr.vmem [resolvable:$true] %s131
      %s133 = sshll.u32 %s4, 4
      %s134 = int_to_ptr.hbm [resolvable:$true] %s133
      %139 = dma.vmem_to_hbm [thread:$0]  %s132, 256, %s134, [#allocation4], 128, 128, 8
    $region21: #{tpu_custom_call.1} parent=1 // pred_fallthru
      _
    // Predicated region
    $region22: #{tpu_custom_call.1} parent=1 // pred_check
      _
    $region23: #{tpu_custom_call.1} parent=1 // pred_check_branch
      %141 = sbr.rel (0) target = $region25
    $region24: #{tpu_custom_call.1} parent=1 // pred_region
      %143 = dma.done [#allocation4], 256
    $region25: #{tpu_custom_call.1} parent=1 // pred_fallthru
      _
    %144 = vsyncpa [#allocation4], 1

</llo_original>
